<compile_context>
chip_gen: v7x
topology: tpu7x:2x2x1
jax: 0.10.0
libtpu: 0.0.40
codegen_flags: <defaults>
</compile_context>

<pallas_src>
import functools

import jax
import jax.numpy as jnp
from jax import lax
from jax.experimental import pallas as pl
from jax.experimental.pallas import tpu as pltpu

LANE = 128
_EPS = 1e-5


def _round_up(v, m):
    return (v + m - 1) // m * m


# ------------------------------ kernel bodies ------------------------------ #
def _write_stats(st_ref, h_f32):
    # Only rows 0 (sum) and 1 (sum of squares) are ever read by _fold_bn;
    # rows 2-7 of the (8, C) stats block are intentionally left unwritten.
    st_ref[0:1, :] = jnp.sum(h_f32, axis=0, keepdims=True)
    st_ref[1:2, :] = jnp.sum(h_f32 * h_f32, axis=0, keepdims=True)


def _stage1_kernel(x_ref, w1_ref, b1_ref, h1_ref, st_ref):
    # conv1 (1x1; stride already folded into the row layout) + stats(h1).
    h = (jnp.dot(x_ref[...], w1_ref[...], preferred_element_type=jnp.float32)
         + b1_ref[...])
    h16 = h.astype(h1_ref.dtype)
    h1_ref[...] = h16
    # Stats are taken on the same (bf16-rounded) values the next stage reads.
    _write_stats(st_ref, h16.astype(jnp.float32))


def _stage2_kernel(h1_ref, sc_ref, sh_ref, w2_ref, b2_ref, h2_ref, st_ref,
                   *, seq_len):
    # norm1 (folded scale/shift) + relu1 + conv2 (k=3) + stats(h2).
    a = jnp.maximum(h1_ref[...].astype(jnp.float32) * sc_ref[...] + sh_ref[...],
                    0.0)
    a16 = a.astype(jnp.bfloat16)                    # single cast for all 3 taps
    rows = a16.shape[0]
    # k=3 conv as three accumulating MXU matmuls.  The t-1 / t+1 taps are
    # realized by rolling the f32 matmul OUTPUTS one row (XLU) and zeroing the
    # rows that crossed a sequence edge (which also kills the roll wrap-around).
    hc = jnp.dot(a16, w2_ref[1], preferred_element_type=jnp.float32)
    hp = pltpu.roll(jnp.dot(a16, w2_ref[0], preferred_element_type=jnp.float32),
                    1, 0)                            # row t now holds tap t-1
    hn = pltpu.roll(jnp.dot(a16, w2_ref[2], preferred_element_type=jnp.float32),
                    rows - 1, 0)                     # row t now holds tap t+1
    pos = lax.broadcasted_iota(jnp.int32, (rows, 1), 0)
    if seq_len < rows:                               # several sequences per tile
        pos = pos % seq_len
    hp = jnp.where(pos == 0, 0.0, hp)
    hn = jnp.where(pos == seq_len - 1, 0.0, hn)
    h = hc + hp + hn + b2_ref[...]
    h16 = h.astype(h2_ref.dtype)
    h2_ref[...] = h16
    _write_stats(st_ref, h16.astype(jnp.float32))


def _stage3_kernel(h2_ref, sc_ref, sh_ref, w3_ref, b3_ref, h3_ref, st_ref):
    # norm2 + relu2 + conv3 (1x1) + stats(h3).
    a = jnp.maximum(h2_ref[...].astype(jnp.float32) * sc_ref[...] + sh_ref[...],
                    0.0)
    h = (jnp.dot(a.astype(jnp.bfloat16), w3_ref[...],
                 preferred_element_type=jnp.float32) + b3_ref[...])
    h16 = h.astype(h3_ref.dtype)
    h3_ref[...] = h16
    _write_stats(st_ref, h16.astype(jnp.float32))


def _stage4_proj_kernel(h3_ref, sc_ref, sh_ref, x_ref, wr_ref, br_ref, out_ref):
    # norm3 + relu3 + residual.  The 1x1 residual projection is RE-COMPUTED here
    # from x (bf16) instead of being round-tripped through HBM as f32.
    a = jnp.maximum(h3_ref[...].astype(jnp.float32) * sc_ref[...] + sh_ref[...],
                    0.0)
    res = (jnp.dot(x_ref[...], wr_ref[...], preferred_element_type=jnp.float32)
           + br_ref[...])
    out_ref[...] = (a + res).astype(out_ref.dtype)


def _stage4_id_kernel(h3_ref, sc_ref, sh_ref, x_ref, out_ref):
    # norm3 + relu3 + identity residual (added from the bf16 x slab).
    a = jnp.maximum(h3_ref[...].astype(jnp.float32) * sc_ref[...] + sh_ref[...],
                    0.0)
    out_ref[...] = (a + x_ref[...].astype(jnp.float32)).astype(out_ref.dtype)


# ------------------------------ wrapper helpers ----------------------------- #
def _pad2(w, rows, cols):
    out = jnp.zeros((rows, cols), jnp.float32)
    return out.at[:w.shape[0], :w.shape[1]].set(w.astype(jnp.float32))


def _pad_row(v, cols):
    out = jnp.zeros((1, cols), jnp.float32)
    return out.at[0, :v.shape[0]].set(v.astype(jnp.float32))


def _fold_bn(stats, count, gamma_row, beta_row, eps=_EPS):
    """Combine per-tile partials; fold affine: scale = g*rsqrt(var+eps),
    shift = beta - mean*scale (single-pass E[h^2]-mean^2 combine)."""
    c = stats.shape[1]
    st = stats.reshape(-1, 8, c)
    s = jnp.sum(st[:, 0, :], axis=0)
    q = jnp.sum(st[:, 1, :], axis=0)
    mean = s / count
    var = jnp.maximum(q / count - mean * mean, 0.0)
    scale = gamma_row * lax.rsqrt(var + eps)[None, :]
    shift = beta_row - mean[None, :] * scale
    return scale, shift


def _vmem_limit_bytes():
    """Generation-aware scoped-VMEM limit (v5e/v6e: 128 MiB phys, v7x: 64 MiB)."""
    try:
        cap = getattr(pltpu.get_tpu_info(), "vmem_capacity_bytes", None)
    except Exception:
        cap = None
    if not cap:
        return 32 * 1024 * 1024                      # known-safe default
    return int(min(96 * 1024 * 1024, max(32 * 1024 * 1024, (cap * 3) // 4)))


def _default_max_tile_rows(widest_cols, vmem_bytes):
    big_vmem = vmem_bytes >= 64 * 1024 * 1024        # v5e / v6e (128 MiB phys)
    if widest_cols <= 256:
        return 4096 if big_vmem else 2048
    if widest_cols <= 512:
        return 2048 if big_vmem else 1024
    return 1024 if big_vmem else 512                 # v7x-safe for wide channels


def _pick_tile_rows(n_seqs, seq_len, max_rows):
    """Row-tile = whole sequences (keeps k=3 shifts tile-local).  Tiles must be
    a multiple of 16 rows (bf16 sublane tiling) or the full array.  Prefers a
    grid of >= 2 tiles (v7x has 2 TensorCores) and never exceeds max_rows."""
    total = n_seqs * seq_len
    cands = []
    for b in range(1, n_seqs + 1):
        if n_seqs % b:
            continue
        rows = b * seq_len
        if rows % 16 != 0 and rows != total:
            continue
        cands.append((rows, n_seqs // b))
    fits = [c for c in cands if c[0] <= max_rows]
    if fits:
        return max(fits, key=lambda c: (c[1] >= 2, c[0]))[0]
    # Nothing fits the budget: smallest legal tile (>= one whole sequence).
    # TODO(synk): support cross-tile halos so a single sequence can be split.
    return min(cands, key=lambda c: c[0])[0]


def _row_spec(tile, cols):
    return pl.BlockSpec((tile, cols), lambda i: (i, 0))


def _const_spec(shape):
    nd = len(shape)
    return pl.BlockSpec(shape, lambda i: (0,) * nd)


# ---------------------------------- wrapper --------------------------------- #
def residual_block(x_ncl, p, downsample=False, max_tile_rows=None):
    """x_ncl: (N, Cin, L) float32, PyTorch Conv1d layout. Returns (N, Cout, L_out)."""
    stride = 2 if downsample else 1
    N, Cin, L = x_ncl.shape
    Med = p["conv1_w"].shape[0]
    Cout = p["conv3_w"].shape[0]
    has_res = p["res_w"] is not None
    if not has_res:
        assert Cin == Cout, "identity residual requires Cin == Cout"
        assert not downsample, "downsample without a residual projection is undefined"

    # NCL -> rows=(N*L_out, channels); stride-2 1x1 conv == subsample L then 1x1
    # conv.  Channels zero-padded to 128 lanes; stored bf16 (only ever a bf16
    # matmul / add operand downstream), halving pre-pass + kernel traffic.
    # TODO(synk): fold this stride/transpose/pad pre-pass into the stage-1 /
    # stage-4 BlockSpec index_maps to save one XLA HBM pass.
    x_nlc = jnp.transpose(x_ncl, (0, 2, 1))[:, ::stride, :]
    L_out = x_nlc.shape[1]
    R = N * L_out
    Cin_p = _round_up(Cin, LANE)
    Med_p = _round_up(Med, LANE)
    Cout_p = _round_up(Cout, LANE)
    x_p = jnp.zeros((R, Cin_p), jnp.bfloat16).at[:, :Cin].set(
        x_nlc.reshape(R, Cin).astype(jnp.bfloat16))

    vmem_limit = _vmem_limit_bytes()
    if max_tile_rows is None:
        max_tile_rows = _default_max_tile_rows(max(Cin_p, Med_p, Cout_p),
                                               vmem_limit)
    tile = _pick_tile_rows(N, L_out, max_tile_rows)
    n_tiles = R // tile

    # Pack conv weights into matmul form (bf16 for the MXU; zero-padded channels
    # stay exactly zero through conv + norm(gamma_pad=0) + relu).
    w1 = _pad2(p["conv1_w"][:, :, 0].T, Cin_p, Med_p).astype(jnp.bfloat16)
    b1 = _pad_row(p["conv1_b"], Med_p)
    w2 = jnp.stack([_pad2(p["conv2_w"][:, :, k].T, Med_p, Med_p)
                    for k in range(3)], axis=0).astype(jnp.bfloat16)
    b2 = _pad_row(p["conv2_b"], Med_p)
    w3 = _pad2(p["conv3_w"][:, :, 0].T, Med_p, Cout_p).astype(jnp.bfloat16)
    b3 = _pad_row(p["conv3_b"], Cout_p)
    g1, be1 = _pad_row(p["g1"], Med_p), _pad_row(p["be1"], Med_p)
    g2, be2 = _pad_row(p["g2"], Med_p), _pad_row(p["be2"], Med_p)
    g3, be3 = _pad_row(p["g3"], Cout_p), _pad_row(p["be3"], Cout_p)

    cparams = pltpu.CompilerParams(
        dimension_semantics=("parallel",),           # row tiles are independent
        vmem_limit_bytes=vmem_limit)

    def stats_spec(c):
        return pl.BlockSpec((8, c), lambda i: (i, 0))

    def stats_shape(c):
        return jax.ShapeDtypeStruct((8 * n_tiles, c), jnp.float32)

    # ---- stage 1: conv1 + stats(h1) (residual projection deferred to stage 4) ----
    h1, st1 = pl.pallas_call(
        _stage1_kernel,
        grid=(n_tiles,),
        in_specs=[_row_spec(tile, Cin_p), _const_spec((Cin_p, Med_p)),
                  _const_spec((1, Med_p))],
        out_specs=(_row_spec(tile, Med_p), stats_spec(Med_p)),
        out_shape=(jax.ShapeDtypeStruct((R, Med_p), jnp.bfloat16),
                   stats_shape(Med_p)),
        compiler_params=cparams,
    )(x_p, w1, b1)

    # ---- stage 2: norm1 + relu1 + conv2 (k=3, 3 accumulating matmuls) + stats ----
    sc1, sh1 = _fold_bn(st1, R, g1, be1)
    h2, st2 = pl.pallas_call(
        functools.partial(_stage2_kernel, seq_len=L_out),
        grid=(n_tiles,),
        in_specs=[_row_spec(tile, Med_p), _const_spec((1, Med_p)),
                  _const_spec((1, Med_p)), _const_spec((3, Med_p, Med_p)),
                  _const_spec((1, Med_p))],
        out_specs=(_row_spec(tile, Med_p), stats_spec(Med_p)),
        out_shape=(jax.ShapeDtypeStruct((R, Med_p), jnp.bfloat16),
                   stats_shape(Med_p)),
        compiler_params=cparams,
    )(h1, sc1, sh1, w2, b2)

    # ---- stage 3: norm2 + relu2 + conv3 + stats(h3) ----
    sc2, sh2 = _fold_bn(st2, R, g2, be2)
    h3, st3 = pl.pallas_call(
        _stage3_kernel,
        grid=(n_tiles,),
        in_specs=[_row_spec(tile, Med_p), _const_spec((1, Med_p)),
                  _const_spec((1, Med_p)), _const_spec((Med_p, Cout_p)),
                  _const_spec((1, Cout_p))],
        out_specs=(_row_spec(tile, Cout_p), stats_spec(Cout_p)),
        out_shape=(jax.ShapeDtypeStruct((R, Cout_p), jnp.bfloat16),
                   stats_shape(Cout_p)),
        compiler_params=cparams,
    )(h2, sc2, sh2, w3, b3)

    # ---- stage 4: norm3 + relu3 + residual (projection recomputed from x_p) ----
    # TODO(synk): emit bf16 / consumer-layout output if the downstream consumer
    # tolerates it, to drop the padded-f32 slice+transpose post-pass.
    sc3, sh3 = _fold_bn(st3, R, g3, be3)
    if has_res:
        wr = _pad2(p["res_w"][:, :, 0].T, Cin_p, Cout_p).astype(jnp.bfloat16)
        br = _pad_row(p["res_b"], Cout_p)
        out_p = pl.pallas_call(
            _stage4_proj_kernel,
            grid=(n_tiles,),
            in_specs=[_row_spec(tile, Cout_p), _const_spec((1, Cout_p)),
                      _const_spec((1, Cout_p)), _row_spec(tile, Cin_p),
                      _const_spec((Cin_p, Cout_p)), _const_spec((1, Cout_p))],
            out_specs=_row_spec(tile, Cout_p),
            out_shape=jax.ShapeDtypeStruct((R, Cout_p), jnp.float32),
            compiler_params=cparams,
        )(h3, sc3, sh3, x_p, wr, br)
    else:
        out_p = pl.pallas_call(
            _stage4_id_kernel,
            grid=(n_tiles,),
            in_specs=[_row_spec(tile, Cout_p), _const_spec((1, Cout_p)),
                      _const_spec((1, Cout_p)), _row_spec(tile, Cin_p)],
            out_specs=_row_spec(tile, Cout_p),
            out_shape=jax.ShapeDtypeStruct((R, Cout_p), jnp.float32),
            compiler_params=cparams,
        )(h3, sc3, sh3, x_p)

    out_nlc = out_p[:, :Cout].reshape(N, L_out, Cout)
    return jnp.transpose(out_nlc, (0, 2, 1))                 # back to NCL


# --------------------------- pure-JAX reference ---------------------------- #
def residual_block_ref(x, p, downsample=False):
    stride = 2 if downsample else 1

    def conv1d(x, w, b, s=1, pad=0):
        y = lax.conv_general_dilated(x, w, window_strides=(s,),
                                     padding=[(pad, pad)],
                                     dimension_numbers=("NCH", "OIH", "NCH"))
        return y + b[None, :, None]

    def bn_relu(h, g, bt):
        mean = jnp.mean(h, axis=(0, 2), keepdims=True)
        var = jnp.mean((h - mean) ** 2, axis=(0, 2), keepdims=True)
        hn = (h - mean) / jnp.sqrt(var + _EPS)
        return jnp.maximum(hn * g[None, :, None] + bt[None, :, None], 0.0)

    residual = (conv1d(x, p["res_w"], p["res_b"], stride)
                if p["res_w"] is not None else x)
    h = bn_relu(conv1d(x, p["conv1_w"], p["conv1_b"], stride), p["g1"], p["be1"])
    h = bn_relu(conv1d(h, p["conv2_w"], p["conv2_b"], 1, 1), p["g2"], p["be2"])
    h = bn_relu(conv1d(h, p["conv3_w"], p["conv3_b"]), p["g3"], p["be3"])
    return h + residual


# --------------------------------- main ------------------------------------ #
def init_params(key, cin, med, cout):
    ks = jax.random.split(key, 8)
    p = {
        "conv1_w": 0.1 * jax.random.normal(ks[0], (med, cin, 1), jnp.float32),
        "conv1_b": 0.01 * jax.random.normal(ks[1], (med,), jnp.float32),
        "conv2_w": 0.1 * jax.random.normal(ks[2], (med, med, 3), jnp.float32),
        "conv2_b": 0.01 * jax.random.normal(ks[3], (med,), jnp.float32),
        "conv3_w": 0.1 * jax.random.normal(ks[4], (cout, med, 1), jnp.float32),
        "conv3_b": 0.01 * jax.random.normal(ks[5], (cout,), jnp.float32),
        # BatchNorm-style affine params (PyTorch default init: weight=1, bias=0)
        "g1": jnp.ones((med,), jnp.float32), "be1": jnp.zeros((med,), jnp.float32),
        "g2": jnp.ones((med,), jnp.float32), "be2": jnp.zeros((med,), jnp.float32),
        "g3": jnp.ones((cout,), jnp.float32), "be3": jnp.zeros((cout,), jnp.float32),
    }
    if cin != cout:
        p["res_w"] = 0.1 * jax.random.normal(ks[6], (cout, cin, 1), jnp.float32)
        p["res_b"] = 0.01 * jax.random.normal(ks[7], (cout,), jnp.float32)
    else:
        p["res_w"] = None
        p["res_b"] = None
    return p


if __name__ == "__main__":
    key = jax.random.PRNGKey(0)
    configs = [
        dict(N=2, Cin=4, Med=8, Cout=16, L=16, downsample=False),   # projected residual
        dict(N=2, Cin=16, Med=8, Cout=16, L=16, downsample=False),  # identity residual
        dict(N=2, Cin=4, Med=8, Cout=16, L=16, downsample=True),    # strided conv1
    ]
    for cfg in configs:
        key, kx, kp = jax.random.split(key, 3)
        x = jax.random.normal(kx, (cfg["N"], cfg["Cin"], cfg["L"]), jnp.float32)
        params = init_params(kp, cfg["Cin"], cfg["Med"], cfg["Cout"])
        # max_tile_rows=16 keeps the grid multi-step even at these tiny shapes
        # so the tiled/pipelined path is exercised.
        out = residual_block(x, params, downsample=cfg["downsample"],
                             max_tile_rows=16)
        out = jax.block_until_ready(out)
        ref = residual_block_ref(x, params, downsample=cfg["downsample"])
        assert out.shape == ref.shape, (out.shape, ref.shape)
        err = float(jnp.max(jnp.abs(out - ref)))
        # bf16 activations / matmul operands (f32 accumulate) vs f32 reference.
        assert jnp.allclose(out, ref, atol=5e-2, rtol=5e-2), (cfg, err)
    print("KERNEL_OK")
</pallas_src>

<mosaic_0001>
module attributes {stable_mosaic.version = 11 : i64} {
  func.func @_stage1_kernel(%arg0: i32, %arg1: memref<16x128xbf16, #tpu.memory_space<vmem>>, %arg2: memref<128x128xbf16, #tpu.memory_space<vmem>>, %arg3: memref<1x128xf32, #tpu.memory_space<vmem>>, %arg4: memref<16x128xbf16, #tpu.memory_space<vmem>>, %arg5: memref<8x128xf32, #tpu.memory_space<vmem>>) attributes {dimension_semantics = [#tpu.dimension_semantics<parallel>], iteration_bounds = array<i64: 2>, scalar_prefetch = 0 : i64, scratch_operands = 0 : i64, tpu.core_type = #tpu.core_type<tc>, window_params = [{transform_indices = @transform_0, window_bounds = array<i64: 16, 128>}, {pipeline_mode = #tpu.pipeline_mode<synchronous>, transform_indices = @transform_1, window_bounds = array<i64: 128, 128>}, {pipeline_mode = #tpu.pipeline_mode<synchronous>, transform_indices = @transform_2, window_bounds = array<i64: 1, 128>}, {transform_indices = @transform_3, window_bounds = array<i64: 16, 128>}, {transform_indices = @transform_4, window_bounds = array<i64: 8, 128>}]} {
    %c0 = arith.constant 0 : index
    %c0_0 = arith.constant 0 : index
    %0 = vector.load %arg1[%c0, %c0_0] : memref<16x128xbf16, #tpu.memory_space<vmem>>, vector<16x128xbf16>
    %c0_1 = arith.constant 0 : index
    %c0_2 = arith.constant 0 : index
    %1 = vector.load %arg2[%c0_1, %c0_2] : memref<128x128xbf16, #tpu.memory_space<vmem>>, vector<128x128xbf16>
    %cst = arith.constant dense<0.000000e+00> : vector<16x128xf32>
    %2 = tpu.matmul %0, %1, %cst {dimension_numbers = #tpu.dot_dimension_numbers<[1], [0], [0], [1], [0, 0, 1, 1], [], []>} : vector<16x128xbf16>, vector<128x128xbf16>, vector<16x128xf32> -> vector<16x128xf32>
    %c0_3 = arith.constant 0 : index
    %c0_4 = arith.constant 0 : index
    %3 = vector.load %arg3[%c0_3, %c0_4] : memref<1x128xf32, #tpu.memory_space<vmem>>, vector<1x128xf32>
    %4 = vector.broadcast %3 : vector<1x128xf32> to vector<16x128xf32>
    %5 = arith.addf %2, %4 : vector<16x128xf32>
    %6 = arith.truncf %5 : vector<16x128xf32> to vector<16x128xbf16>
    %c0_5 = arith.constant 0 : index
    %c0_6 = arith.constant 0 : index
    %7 = vector.load %arg4[%c0_5, %c0_6] : memref<16x128xbf16, #tpu.memory_space<vmem>>, vector<16x128xbf16>
    tpu.vector_store %arg4[%c0_5, %c0_6], %6 {strides = array<i32>} : memref<16x128xbf16, #tpu.memory_space<vmem>>, vector<16x128xbf16>,
    %8 = arith.extf %6 : vector<16x128xbf16> to vector<16x128xf32>
    %cst_7 = arith.constant dense<0.000000e+00> : vector<128xf32>
    %9 = vector.multi_reduction <add>, %8, %cst_7 [0] : vector<16x128xf32> to vector<128xf32>
    %10 = vector.shape_cast %9 : vector<128xf32> to vector<1x128xf32>
    %c0_8 = arith.constant 0 : index
    %c0_9 = arith.constant 0 : index
    %11 = vector.load %arg5[%c0_8, %c0_9] : memref<8x128xf32, #tpu.memory_space<vmem>>, vector<1x128xf32>
    tpu.vector_store %arg5[%c0_8, %c0_9], %10 {strides = array<i32>} : memref<8x128xf32, #tpu.memory_space<vmem>>, vector<1x128xf32>,
    %12 = arith.mulf %8, %8 : vector<16x128xf32>
    %cst_10 = arith.constant dense<0.000000e+00> : vector<128xf32>
    %13 = vector.multi_reduction <add>, %12, %cst_10 [0] : vector<16x128xf32> to vector<128xf32>
    %14 = vector.shape_cast %13 : vector<128xf32> to vector<1x128xf32>
    %c1 = arith.constant 1 : index
    %c0_11 = arith.constant 0 : index
    %15 = vector.load %arg5[%c1, %c0_11] : memref<8x128xf32, #tpu.memory_space<vmem>>, vector<1x128xf32>
    tpu.vector_store %arg5[%c1, %c0_11], %14 {strides = array<i32>} : memref<8x128xf32, #tpu.memory_space<vmem>>, vector<1x128xf32>,
    return
  }
  func.func @transform_0(%arg0: i32) -> (i32, i32) {
    %c0_i32 = arith.constant 0 : i32
    %c0_i32_0 = arith.constant 0 : i32
    return %arg0, %c0_i32 : i32, i32
  }
  func.func @transform_1(%arg0: i32) -> (i32, i32) {
    %c0_i32 = arith.constant 0 : i32
    %c0_i32_0 = arith.constant 0 : i32
    %c0_i32_1 = arith.constant 0 : i32
    return %c0_i32, %c0_i32_0 : i32, i32
  }
  func.func @transform_2(%arg0: i32) -> (i32, i32) {
    %c0_i32 = arith.constant 0 : i32
    %c0_i32_0 = arith.constant 0 : i32
    %c0_i32_1 = arith.constant 0 : i32
    return %c0_i32, %c0_i32_0 : i32, i32
  }
  func.func @transform_3(%arg0: i32) -> (i32, i32) {
    %c0_i32 = arith.constant 0 : i32
    %c0_i32_0 = arith.constant 0 : i32
    return %arg0, %c0_i32 : i32, i32
  }
  func.func @transform_4(%arg0: i32) -> (i32, i32) {
    %c0_i32 = arith.constant 0 : i32
    %c0_i32_0 = arith.constant 0 : i32
    return %arg0, %c0_i32 : i32, i32
  }
}

</mosaic_0001>

<llo_original>
// kernel: tpu_custom_call.1
$region0: #{tpu_custom_call.1}
  #allocation0 [shape = 'u32[]', space=smem, size = 0x4, offset = 0x4, fixed_abs, tag = 'smem constant byte address 0x4 - core index']
  #allocation1 [shape = 'u32[144,128]{1,0:T(1,128)}', space=vmem, size = 0x12000, scoped, tag = 'internal scratch']
  %s0 = inlined_call_operand.hbm [shape: bf16[32,128], index: 0, kind: input, shape index: {}]
  %s1 = inlined_call_operand.hbm [shape: bf16[128,128], index: 1, kind: input, shape index: {}]
  %s2 = inlined_call_operand.vmem [shape: f32[1,128], index: 2, kind: input, shape index: {}]
  %s3 = inlined_call_operand.hbm [shape: bf16[32,128], index: 3, kind: output, shape index: {0}]
  %s4 = inlined_call_operand.hbm [shape: f32[16,128], index: 4, kind: output, shape index: {1}]
  %5 = xla_tuple %s3, %s4
  %s6 = sld [smem:[#allocation0]]
  $region61: #{tpu_custom_call.1} parent=0
    _
  %s8 = ssub.s32 1, %s6
  %s9 = scalar_select 0, %s8, %s6
  $region1: #{tpu_custom_call.1} parent=0
    #allocation2 [shape = 'u8[8192]{0}', space=vmem, size = 0x2000, scoped, tag = 'input window, operand 0']
    #allocation3 [shape = 's32[2]{0}', space=sflag, size = 0x8, scoped, tag = 'scoped memory for tpu_custom_call.1']
    #allocation4 [shape = 's32[2]{0}', space=sflag, size = 0x8, scoped, tag = 'scoped memory for tpu_custom_call.1']
    #allocation5 [shape = 'u8[32768]{0}', space=vmem, size = 0x8000, scoped, tag = 'input window, operand 1, single buffered']
    #allocation6 [shape = 's32[1]{0}', space=sflag, size = 0x4, scoped, tag = 'scoped memory for tpu_custom_call.1']
    #allocation7 [shape = 'u8[8192]{0}', space=vmem, size = 0x2000, scoped, tag = 'output window, operand 0']
    #allocation8 [shape = 'u8[8192]{0}', space=vmem, size = 0x2000, scoped, tag = 'output window, operand 1']
    #allocation9 [shape = 's32[2]{0}', space=sflag, size = 0x8, scoped, tag = 'scoped memory for tpu_custom_call.1']
    %10 = vsyncpa [#allocation3], 0
    %s11 = scalar_lea.sflag [#allocation3], 1
    %12 = vsyncpa %s11, 0
    %13 = vsyncpa [#allocation6], 0
    %14 = vsyncpa [#allocation4], 0
    %s15 = scalar_lea.sflag [#allocation4], 1
    %16 = vsyncpa %s15, 0
    %17 = vsyncpa [#allocation9], 0
    %s18 = scalar_lea.sflag [#allocation9], 1
    %19 = vsyncpa %s18, 0
    loop: start=0, step=1, limit=4
    $region2: #{tpu_custom_call.1} parent=1 // loop_pre_header
      _
    $region3: #{tpu_custom_call.1} parent=1 // loop_header
      %s21 = sphi 0, %s25
      %p22 = scmp.ge.s32.totalorder %s21, 4
      %s31 = sphi 0, %s33
      %s34 = sphi 0, %s31
      %s35 = sphi 0, %s34
      %s51 = sphi 0, %s35
      %s55 = sphi 0, %s55
      %s57 = sphi 0, %s55
      %s58 = sphi 0, %s57
      %s72 = sphi 0, %s58
      %s76 = sphi 0, %s76
      %s78 = sphi 0, %s76
      %s79 = sphi 0, %s78
      %s93 = sphi 0, %s79
      %s99 = sphi 0, %s101
      %s102 = sphi 0, %s99
      %s103 = sphi 0, %s102
      %s119 = sphi 0, %s103
      %s125 = sphi 0, %s127
      %s128 = sphi 0, %s125
      %s129 = sphi 0, %s128
      %s145 = sphi 0, %s129
    $region4: #{tpu_custom_call.1} parent=1 // loop_header_branch
      %24 = sbr.rel (%p22) target = $region8
    $region5: #{tpu_custom_call.1} parent=1 // loop_body
      %s26 = ssub.s32 %s21, 1
      %s27 = ssub.s32 %s21, 2
      %s28 = sadd.s32 %s21, 1
      %s29 = ssub.s32 %s21, %s28
      %p30 = scmp.eq.s32.totalorder %s29, 0
      %s32 = sadd.s32 %s31, 1
      %s33 = scalar_select %p30, %s31, %s32
      %p36 = pneg %p30
      %p37 = scmp.eq.s32.totalorder %s21, 1
      %p38 = por %p36, %p37
      %p39 = scmp.ne.s32.totalorder %s31, %s34
      %p40 = scmp.eq.s32.totalorder %s21, 0
      %p41 = por %p39, %p40
      %p42 = scmp.ne.s32.totalorder %s31, %s34
      %p43 = scmp.eq.s32.totalorder %s26, 1
      %p44 = por %p42, %p43
      %p45 = scmp.ne.s32.totalorder %s34, %s35
      %p46 = scmp.eq.s32.totalorder %s26, 0
      %p47 = por %p45, %p46
      %p48 = scmp.ne.s32.totalorder %s34, %s35
      %p49 = scmp.eq.s32.totalorder %s27, 1
      %p50 = por %p48, %p49
      %p52 = scmp.ne.s32.totalorder %s35, %s51
      %p53 = scmp.eq.s32.totalorder %s27, 0
      %p54 = por %p52, %p53
      %s56 = sadd.s32 %s55, 1
      %p59 = scmp.eq.s32.totalorder %s21, 1
      %p60 = scmp.ne.s32.totalorder %s55, %s57
      %p61 = scmp.eq.s32.totalorder %s21, 0
      %p62 = por %p60, %p61
      %p63 = scmp.ne.s32.totalorder %s55, %s57
      %p64 = scmp.eq.s32.totalorder %s26, 1
      %p65 = por %p63, %p64
      %p66 = scmp.ne.s32.totalorder %s57, %s58
      %p67 = scmp.eq.s32.totalorder %s26, 0
      %p68 = por %p66, %p67
      %p69 = scmp.ne.s32.totalorder %s57, %s58
      %p70 = scmp.eq.s32.totalorder %s27, 1
      %p71 = por %p69, %p70
      %p73 = scmp.ne.s32.totalorder %s58, %s72
      %p74 = scmp.eq.s32.totalorder %s27, 0
      %p75 = por %p73, %p74
      %s77 = sadd.s32 %s76, 1
      %p80 = scmp.eq.s32.totalorder %s21, 1
      %p81 = scmp.ne.s32.totalorder %s76, %s78
      %p82 = scmp.eq.s32.totalorder %s21, 0
      %p83 = por %p81, %p82
      %p84 = scmp.ne.s32.totalorder %s76, %s78
      %p85 = scmp.eq.s32.totalorder %s26, 1
      %p86 = por %p84, %p85
      %p87 = scmp.ne.s32.totalorder %s78, %s79
      %p88 = scmp.eq.s32.totalorder %s26, 0
      %p89 = por %p87, %p88
      %p90 = scmp.ne.s32.totalorder %s78, %s79
      %p91 = scmp.eq.s32.totalorder %s27, 1
      %p92 = por %p90, %p91
      %p94 = scmp.ne.s32.totalorder %s79, %s93
      %p95 = scmp.eq.s32.totalorder %s27, 0
      %p96 = por %p94, %p95
      %s97 = ssub.s32 %s21, %s28
      %p98 = scmp.eq.s32.totalorder %s97, 0
      %s100 = sadd.s32 %s99, 1
      %s101 = scalar_select %p98, %s99, %s100
      %p104 = pneg %p98
      %p105 = scmp.eq.s32.totalorder %s21, 1
      %p106 = por %p104, %p105
      %p107 = scmp.ne.s32.totalorder %s99, %s102
      %p108 = scmp.eq.s32.totalorder %s21, 0
      %p109 = por %p107, %p108
      %p110 = scmp.ne.s32.totalorder %s99, %s102
      %p111 = scmp.eq.s32.totalorder %s26, 1
      %p112 = por %p110, %p111
      %p113 = scmp.ne.s32.totalorder %s102, %s103
      %p114 = scmp.eq.s32.totalorder %s26, 0
      %p115 = por %p113, %p114
      %p116 = scmp.ne.s32.totalorder %s102, %s103
      %p117 = scmp.eq.s32.totalorder %s27, 1
      %p118 = por %p116, %p117
      %p120 = scmp.ne.s32.totalorder %s103, %s119
      %p121 = scmp.eq.s32.totalorder %s27, 0
      %p122 = por %p120, %p121
      %s123 = ssub.s32 %s21, %s28
      %p124 = scmp.eq.s32.totalorder %s123, 0
      %s126 = sadd.s32 %s125, 1
      %s127 = scalar_select %p124, %s125, %s126
      %p130 = pneg %p124
      %p131 = scmp.eq.s32.totalorder %s21, 1
      %p132 = por %p130, %p131
      %p133 = scmp.ne.s32.totalorder %s125, %s128
      %p134 = scmp.eq.s32.totalorder %s21, 0
      %p135 = por %p133, %p134
      %p136 = scmp.ne.s32.totalorder %s125, %s128
      %p137 = scmp.eq.s32.totalorder %s26, 1
      %p138 = por %p136, %p137
      %p139 = scmp.ne.s32.totalorder %s128, %s129
      %p140 = scmp.eq.s32.totalorder %s26, 0
      %p141 = por %p139, %p140
      %p142 = scmp.ne.s32.totalorder %s128, %s129
      %p143 = scmp.eq.s32.totalorder %s27, 1
      %p144 = por %p142, %p143
      %p146 = scmp.ne.s32.totalorder %s129, %s145
      %p147 = scmp.eq.s32.totalorder %s27, 0
      %p148 = por %p146, %p147
      %p149 = scmp.le.s32.totalorder 1, %s21
      %p150 = scmp.lt.s32.totalorder %s21, 3
      %p151 = pnand %p149, %p150
      %p152 = pneg %p151
      // Predicated region
      $region9: #{tpu_custom_call.1} parent=5 // pred_check
        _
      $region10: #{tpu_custom_call.1} parent=5 // pred_check_branch
        %154 = sbr.rel (%p151) target = $region12
      $region11: #{tpu_custom_call.1} parent=5 // pred_region
        %s155 = ssub.s32 %s21, 1
        // Predicated region
        $region13: #{tpu_custom_call.1} parent=11 // pred_check
          %p156 = pneg %p68
        $region14: #{tpu_custom_call.1} parent=11 // pred_check_branch
          %158 = sbr.rel (%p156) target = $region16
        $region15: #{tpu_custom_call.1} parent=11 // pred_region
          %s160 = ssub.s32 1024, 1024
          %161 = vsyncadd [#allocation6], %s160
          %s162 = sshll.u32 [#allocation5], 4
          %s163 = int_to_ptr.vmem [resolvable:$true] %s162
          %168 = dma.hbm_to_vmem [thread:$0]  %s1, 1024, %s163, [#allocation6], 64, 64, 4
        $region16: #{tpu_custom_call.1} parent=11 // pred_fallthru
          _
        // Predicated region
        $region17: #{tpu_custom_call.1} parent=11 // pred_check
          %p169 = pneg %p89
        $region18: #{tpu_custom_call.1} parent=11 // pred_check_branch
          %171 = sbr.rel (%p169) target = $region20
        $region19: #{tpu_custom_call.1} parent=11 // pred_region
          _
        $region20: #{tpu_custom_call.1} parent=11 // pred_fallthru
          _
      $region12: #{tpu_custom_call.1} parent=5 // pred_fallthru
        _
      %p172 = scmp.lt.s32.totalorder %s21, 2
      // Predicated region
      $region21: #{tpu_custom_call.1} parent=5 // pred_check
        %p173 = pneg %p172
      $region22: #{tpu_custom_call.1} parent=5 // pred_check_branch
        %175 = sbr.rel (%p173) target = $region24
      $region23: #{tpu_custom_call.1} parent=5 // pred_region
        // Predicated region
        $region25: #{tpu_custom_call.1} parent=23 // pred_check
          %p176 = pneg %p41
        $region26: #{tpu_custom_call.1} parent=23 // pred_check_branch
          %178 = sbr.rel (%p176) target = $region28
        $region27: #{tpu_custom_call.1} parent=23 // pred_region
          %s179 = sand.u32 %s31, 1
          %s180 = scalar_lea.sflag [#allocation3], %s179
          %s181 = sand.u32 %s31, 1
          %s182 = smul.addr %s181, 8
          %s183 = scalar_lea.vmem [#allocation2], %s182
          %s184 = smul.u32 2, %s21
          %s186 = ssub.s32 128, 128
          %187 = vsyncadd %s180, %s186
          %s188 = smul.addr %s184, 64
          %s189 = scalar_lea.hbm %s0, %s188
          %s190 = sshll.u32 %s183, 4
          %s191 = int_to_ptr.vmem [resolvable:$true] %s190
          %196 = dma.hbm_to_vmem [thread:$0]  %s189, 128, %s191, %s180, 64, 64, 4
        $region28: #{tpu_custom_call.1} parent=23 // pred_fallthru
          _
      $region24: #{tpu_custom_call.1} parent=5 // pred_fallthru
        _
      %p197 = scmp.le.s32.totalorder 1, %s21
      %p198 = scmp.lt.s32.totalorder %s21, 3
      %p199 = pnand %p197, %p198
      %p200 = pneg %p199
      // Predicated region
      $region29: #{tpu_custom_call.1} parent=5 // pred_check
        _
      $region30: #{tpu_custom_call.1} parent=5 // pred_check_branch
        %202 = sbr.rel (%p199) target = $region32
      $region31: #{tpu_custom_call.1} parent=5 // pred_region
        %s203 = ssub.s32 %s21, 1
        %s204 = sand.u32 %s34, 1
        %s205 = scalar_lea.sflag [#allocation3], %s204
        %s206 = sand.u32 %s34, 1
        %s207 = smul.addr %s206, 8
        %s208 = scalar_lea.vmem [#allocation2], %s207
        // Predicated region
        $region33: #{tpu_custom_call.1} parent=31 // pred_check
          %p209 = pneg %p47
        $region34: #{tpu_custom_call.1} parent=31 // pred_check_branch
          %211 = sbr.rel (%p209) target = $region36
        $region35: #{tpu_custom_call.1} parent=31 // pred_region
          %212 = dma.done %s205, 128
        $region36: #{tpu_custom_call.1} parent=31 // pred_fallthru
          _
        // Predicated region
        $region37: #{tpu_custom_call.1} parent=31 // pred_check
          %p213 = pneg %p68
        $region38: #{tpu_custom_call.1} parent=31 // pred_check_branch
          %215 = sbr.rel (%p213) target = $region40
        $region39: #{tpu_custom_call.1} parent=31 // pred_region
          %216 = dma.done [#allocation6], 1024
        $region40: #{tpu_custom_call.1} parent=31 // pred_fallthru
          _
        %s217 = sand.u32 %s34, 1
        %s218 = scalar_lea.sflag [#allocation3], %s217
        %s219 = sand.u32 %s34, 1
        %s220 = smul.addr %s219, 8
        %s221 = scalar_lea.vmem [#allocation2], %s220
        %p222 = pneg %p47
        %p223 = pneg %p44
        %p224 = pneg %p68
        %p225 = pneg %p65
        %p226 = pneg %p89
        %p227 = pneg %p86
        %p228 = pneg %p115
        %p229 = pneg %p112
        %s230 = sand.u32 %s102, 1
        %s231 = scalar_lea.sflag [#allocation4], %s230
        %s232 = sand.u32 %s102, 1
        %s233 = smul.addr %s232, 8
        %s234 = scalar_lea.vmem [#allocation7], %s233
        %p235 = pneg %p141
        %p236 = pneg %p138
        %s237 = sand.u32 %s128, 1
        %s238 = scalar_lea.sflag [#allocation9], %s237
        %s239 = sand.u32 %s128, 1
        %s240 = smul.addr %s239, 8
        %s241 = scalar_lea.vmem [#allocation8], %s240
        %s242 = smul.u32 2, %s26
        %s243 = smul.u32 2, %s26
        %v245 = vld [vmem:[%s208] sm:$0xf]
        %v246 = vld [vmem:[%s208 + $0x4] sm:$0xf]
        %v247 = vld [vmem:[#allocation5] sm:$0xf]
        %v248 = vld [vmem:[#allocation5 + $0x4] sm:$0xf]
        %v249 = vld [vmem:[#allocation5 + $0x8] sm:$0xf]
        %v250 = vld [vmem:[#allocation5 + $0xc] sm:$0xf]
        %v251 = vld [vmem:[#allocation5 + $0x10] sm:$0xf]
        %v252 = vld [vmem:[#allocation5 + $0x14] sm:$0xf]
        %v253 = vld [vmem:[#allocation5 + $0x18] sm:$0xf]
        %v254 = vld [vmem:[#allocation5 + $0x1c] sm:$0xf]
        %v255 = vld [vmem:[#allocation5 + $0x20] sm:$0xf]
        %v256 = vld [vmem:[#allocation5 + $0x24] sm:$0xf]
        %v257 = vld [vmem:[#allocation5 + $0x28] sm:$0xf]
        %v258 = vld [vmem:[#allocation5 + $0x2c] sm:$0xf]
        %v259 = vld [vmem:[#allocation5 + $0x30] sm:$0xf]
        %v260 = vld [vmem:[#allocation5 + $0x34] sm:$0xf]
        %v261 = vld [vmem:[#allocation5 + $0x38] sm:$0xf]
        %v262 = vld [vmem:[#allocation5 + $0x3c] sm:$0xf]
        %v263 = vld [vmem:[%s2] sm:$0x1]
        %v265 = vlaneseq
        %v266 = vshrl.u32 %v265, 7
        %v267 = vsub.s32 0, %v266
        %v268 = vrot.slane %v263, %v267
        %v272 = vunpack.c.l.b16 %v245
        %v273 = vunpack.c.l.b16 %v246
        %v274 = vpack.c.b16 %v273, %v272
        %v292 = vunpack.c.l.b16 %v247
        %v293 = vunpack.c.l.b16 %v248
        %v294 = vunpack.c.l.b16 %v249
        %v295 = vunpack.c.l.b16 %v250
        %v296 = vunpack.c.l.b16 %v251
        %v297 = vunpack.c.l.b16 %v252
        %v298 = vunpack.c.l.b16 %v253
        %v299 = vunpack.c.l.b16 %v254
        %v300 = vunpack.c.l.b16 %v255
        %v301 = vunpack.c.l.b16 %v256
        %v302 = vunpack.c.l.b16 %v257
        %v303 = vunpack.c.l.b16 %v258
        %v304 = vunpack.c.l.b16 %v259
        %v305 = vunpack.c.l.b16 %v260
        %v306 = vunpack.c.l.b16 %v261
        %v307 = vunpack.c.l.b16 %v262
        %v308 = vpack.c.b16 %v293, %v292
        %v309 = vpack.c.b16 %v295, %v294
        %v310 = vpack.c.b16 %v297, %v296
        %v311 = vpack.c.b16 %v299, %v298
        %v312 = vpack.c.b16 %v301, %v300
        %v313 = vpack.c.b16 %v303, %v302
        %v314 = vpack.c.b16 %v305, %v304
        %v315 = vpack.c.b16 %v307, %v306
        %324 = vmatprep.subr.bf16.mxu0 0
        %325 = vmatpush1.bf16.msra.mxu0 %v308
        %326 = vmatprep.subr.bf16.mxu0 0
        %327 = vmatpush1.bf16.msra.mxu0 %v309
        %328 = vmatprep.subr.bf16.mxu0 0
        %329 = vmatpush1.bf16.msra.mxu0 %v310
        %330 = vmatprep.subr.bf16.mxu0 0
        %331 = vmatpush1.bf16.msra.mxu0 %v311
        %332 = vmatprep.subr.bf16.mxu0 0
        %333 = vmatpush1.bf16.msra.mxu0 %v312
        %334 = vmatprep.subr.bf16.mxu0 0
        %335 = vmatpush1.bf16.msra.mxu0 %v313
        %336 = vmatprep.subr.bf16.mxu0 0
        %337 = vmatpush1.bf16.msra.mxu0 %v314
        %338 = vmatprep.subr.bf16.mxu0 0
        %339 = vmatpush1.bf16.msra.mxu0 %v315
        %340 = vmatprep.subr.bf16.mxu0 0
        %341 = vmatpush1.bf16.msra.mxu0 0
        %342 = vmatprep.subr.bf16.mxu0 0
        %343 = vmatpush1.bf16.msra.mxu0 0
        %344 = vmatprep.subr.bf16.mxu0 0
        %345 = vmatpush1.bf16.msra.mxu0 0
        %346 = vmatprep.subr.bf16.mxu0 0
        %347 = vmatpush1.bf16.msra.mxu0 0
        %348 = vmatprep.subr.bf16.mxu0 0
        %349 = vmatpush1.bf16.msra.mxu0 0
        %350 = vmatprep.subr.bf16.mxu0 0
        %351 = vmatpush1.bf16.msra.mxu0 0
        %352 = vmatprep.subr.bf16.mxu0 0
        %353 = vmatpush1.bf16.msra.mxu0 0
        %354 = vmatprep.subr.bf16.mxu0 0
        %355 = vmatpush1.bf16.msra.mxu0 0
        %356 = vmatprep.mubr.bf16.mxu0 0
        %357 = vmatmul.mubr.bf16.gmra.mrb[0].mxu0 %v274
        %v358 = vpop.f32.mrb[0].mxu0
        %v359 = vadd.f32 %v268, %v358
        %v360 = vpop.f32.mrb[0].mxu0
        %v361 = vpop.f32.mrb[0].mxu0
        %v362 = vadd.f32 %v268, %v361
        %v363 = vpop.f32.mrb[0].mxu0
        %364 = vdwg.mxu0
        %v365 = vpack.c.bf16 %v362, %v359
        %v367 = vunpack.c.l.b16 %v365
        %v368 = vunpack.c.h.b16 %v365
        %v369 = vpack.c.b16 %v367, %v367
        %v370 = vpack.c.b16 %v368, %v368
        %373 = vst [vmem:[%s234] sm:$0xf] %v369
        %374 = vst [vmem:[%s234 + $0x4] sm:$0xf] %v370
        %v375 = vunpack.c.l.bf16 %v365
        %v376 = vunpack.c.h.bf16 %v365
        %v377 = vadd.f32 %v375, %v376
        %v378 = vrot.slane %v377, 4
        %v379 = vadd.f32 %v377, %v378
        %v380 = vrot.slane %v379, 2
        %v381 = vadd.f32 %v379, %v380
        %v382 = vrot.slane %v381, 1
        %v383 = vadd.f32 %v381, %v382
        %384 = vst [vmem:[%s241] sm:$0x1] %v383
        %v385 = vmul.f32 %v375, %v375
        %v386 = vmul.f32 %v376, %v376
        %v387 = vadd.f32 %v385, %v386
        %v388 = vrot.slane %v387, 4
        %v389 = vadd.f32 %v387, %v388
        %v390 = vrot.slane %v389, 2
        %v391 = vadd.f32 %v389, %v390
        %v392 = vrot.slane %v391, 1
        %v393 = vadd.f32 %v391, %v392
        %394 = vst [vmem:[%s241 + $0x1] sm:$0x1] %v393
        %s395 = sand.u32 %s102, 1
        %s396 = scalar_lea.sflag [#allocation4], %s395
        %s397 = sand.u32 %s102, 1
        %s398 = smul.addr %s397, 8
        %s399 = scalar_lea.vmem [#allocation7], %s398
        %s400 = sand.u32 %s128, 1
        %s401 = scalar_lea.sflag [#allocation9], %s400
        %s402 = sand.u32 %s128, 1
        %s403 = smul.addr %s402, 8
        %s404 = scalar_lea.vmem [#allocation8], %s403
        // Predicated region
        $region41: #{tpu_custom_call.1} parent=31 // pred_check
          %p405 = pneg %p112
        $region42: #{tpu_custom_call.1} parent=31 // pred_check_branch
          %407 = sbr.rel (%p405) target = $region44
        $region43: #{tpu_custom_call.1} parent=31 // pred_region
          %s408 = smul.u32 2, %s26
          %s410 = ssub.s32 128, 128
          %411 = vsyncadd %s396, %s410
          %s412 = smul.addr %s408, 64
          %s413 = scalar_lea.hbm %s3, %s412
          %s414 = sshll.u32 %s399, 4
          %s415 = int_to_ptr.vmem [resolvable:$true] %s414
          %420 = dma.vmem_to_hbm [thread:$0]  %s415, 128, %s413, %s396, 64, 64, 4
        $region44: #{tpu_custom_call.1} parent=31 // pred_fallthru
          _
        // Predicated region
        $region45: #{tpu_custom_call.1} parent=31 // pred_check
          %p421 = pneg %p138
        $region46: #{tpu_custom_call.1} parent=31 // pred_check_branch
          %423 = sbr.rel (%p421) target = $region48
        $region47: #{tpu_custom_call.1} parent=31 // pred_region
          %s425 = ssub.s32 128, 128
          %426 = vsyncadd %s401, %s425
          %s427 = smul.addr %s26, 128
          %s428 = scalar_lea.hbm %s4, %s427
          %s430 = sshll.u32 %s404, 4
          %s431 = int_to_ptr.vmem [resolvable:$true] %s430
          %433 = dma.vmem_to_hbm [thread:$0]  %s431, 128, %s428, %s401
        $region48: #{tpu_custom_call.1} parent=31 // pred_fallthru
          _
      $region32: #{tpu_custom_call.1} parent=5 // pred_fallthru
        _
      %p434 = scmp.le.s32.totalorder 2, %s21
      // Predicated region
      $region49: #{tpu_custom_call.1} parent=5 // pred_check
        %p435 = pneg %p434
      $region50: #{tpu_custom_call.1} parent=5 // pred_check_branch
        %437 = sbr.rel (%p435) target = $region52
      $region51: #{tpu_custom_call.1} parent=5 // pred_region
        %s438 = ssub.s32 %s21, 2
        // Predicated region
        $region53: #{tpu_custom_call.1} parent=51 // pred_check
          %p439 = pneg %p118
        $region54: #{tpu_custom_call.1} parent=51 // pred_check_branch
          %441 = sbr.rel (%p439) target = $region56
        $region55: #{tpu_custom_call.1} parent=51 // pred_region
          %s442 = sand.u32 %s103, 1
          %s443 = scalar_lea.sflag [#allocation4], %s442
          %s444 = sand.u32 %s103, 1
          %s445 = smul.addr %s444, 8
          %s446 = scalar_lea.vmem [#allocation7], %s445
          %447 = dma.done %s443, 128
        $region56: #{tpu_custom_call.1} parent=51 // pred_fallthru
          _
        // Predicated region
        $region57: #{tpu_custom_call.1} parent=51 // pred_check
          %p448 = pneg %p144
        $region58: #{tpu_custom_call.1} parent=51 // pred_check_branch
          %450 = sbr.rel (%p448) target = $region60
        $region59: #{tpu_custom_call.1} parent=51 // pred_region
          %s451 = sand.u32 %s129, 1
          %s452 = scalar_lea.sflag [#allocation9], %s451
          %s453 = sand.u32 %s129, 1
          %s454 = smul.addr %s453, 8
          %s455 = scalar_lea.vmem [#allocation8], %s454
          %456 = dma.done %s452, 128
        $region60: #{tpu_custom_call.1} parent=51 // pred_fallthru
          _
      $region52: #{tpu_custom_call.1} parent=5 // pred_fallthru
        _
    $region6: #{tpu_custom_call.1} parent=1 // loop_footer
      %s25 = sadd.s32 1, %s21
    $region7: #{tpu_custom_call.1} parent=1 // loop_footer_branch
      %20 = sbr.rel target = $region3
    $region8: #{tpu_custom_call.1} parent=1 // loop_exit
      _
    %457 = vsyncpa [#allocation3], 1
    %s458 = scalar_lea.sflag [#allocation3], 1
    %459 = vsyncpa %s458, 1
    %460 = vsyncpa [#allocation6], 1
    %461 = vsyncpa [#allocation4], 1
    %s462 = scalar_lea.sflag [#allocation4], 1
    %463 = vsyncpa %s462, 1
    %464 = vsyncpa [#allocation9], 1
    %s465 = scalar_lea.sflag [#allocation9], 1
    %466 = vsyncpa %s465, 1

</llo_original>
